<compile_context>
chip_gen: v6e
topology: v6e:2x2x1
jax: 0.10.0
libtpu: 0.0.40
codegen_flags: <defaults>
</compile_context>

<pallas_src>
import jax
import jax.numpy as jnp
from jax.experimental import pallas as pl
from jax.experimental.pallas import tpu as pltpu


def mlp_kernel(x_ref, w1_ref, b1_ref, w2_ref, b2_ref, w3_ref,
               a1_ref, a2_ref, b3_ref, o_ref):
    x = x_ref[...]                                                # (tb, size)

    # Linear 1 + PReLU (single learnable slope; PyTorch default num_parameters=1)
    h1 = jnp.dot(x, w1_ref[...], preferred_element_type=jnp.float32) + b1_ref[...]
    h1 = jnp.where(h1 >= 0, h1, a1_ref[0] * h1)                   # f32 on VPU

    # Linear 2 + PReLU
    h2 = jnp.dot(h1.astype(w2_ref.dtype), w2_ref[...],
                 preferred_element_type=jnp.float32) + b2_ref[...]
    h2 = jnp.where(h2 >= 0, h2, a2_ref[0] * h2)

    # Linear 3 (32 -> 1): VPU multiply + lane reduce, f32 throughout.
    y = jnp.sum(h2 * w3_ref[...], axis=-1, keepdims=True) + b3_ref[0]
    o_ref[...] = y.astype(o_ref.dtype)


def _round_up(x, m):
    return -(-x // m) * m


def _tpu_generation():
    try:
        kind = jax.devices()[0].device_kind.lower()
    except Exception:
        return None
    if "v5" in kind:
        return 5
    if "v6" in kind:
        return 6
    if "v7" in kind or "7x" in kind:
        return 7
    return None


def _pick_tile(B, size, itemsize, tb, *, min_steps=1, x_budget_bytes=12 << 20):
    """Largest multiple-of-128 batch tile whose double-buffered, lane-padded x
    footprint fits `x_budget_bytes` (cap 4096); optionally capped so the grid
    has >= min_steps steps (v7x megacore)."""
    padded_size = _round_up(size, 128)              # VMEM pads the lane dim to 128
    max_rows = x_budget_bytes // (2 * padded_size * itemsize)
    max_rows = max(128, (max_rows // 128) * 128)
    tb = max(128, min(tb, max_rows, 4096))
    tb = (tb // 128) * 128
    if min_steps > 1 and B > 128:
        per_step = _round_up(-(-B // min_steps), 128)
        return min(tb, per_step)
    if B <= tb:
        return B                                    # one tile covering the batch
    return tb


def mlp_forward(x, params, *, tb=2048, compute_dtype="auto"):
    B, size = x.shape
    w1, b1, w2, b2, w3_row, a1, a2, b3 = params

    gen = _tpu_generation()
    if compute_dtype == "auto":
        # bf16 streaming of x / w1 / w2 halves the dominant HBM traffic on
        # v6e / v7x; accumulation, PReLU and layer 3 stay f32.
        compute_dtype = jnp.bfloat16 if gen in (6, 7) else None
    if compute_dtype is not None:
        x = x.astype(compute_dtype)
        w1 = w1.astype(compute_dtype)
        w2 = w2.astype(compute_dtype)

    # v7x: two TensorCores share the "parallel" batch axis -> need >= 2 grid
    # steps when there is enough work; v5e/v6e run the grid serially -> one big
    # tile minimizes the ~0.35 us per-step overhead.
    min_steps = 2 if (gen == 7 and B >= 256) else 1
    tb = _pick_tile(B, size, jnp.dtype(x.dtype).itemsize, tb, min_steps=min_steps)
    grid = (pl.cdiv(B, tb),)

    full = lambda arr: pl.BlockSpec(arr.shape, lambda i: (0,) * arr.ndim)
    smem = pl.BlockSpec(memory_space=pltpu.MemorySpace.SMEM)

    return pl.pallas_call(
        mlp_kernel,
        out_shape=jax.ShapeDtypeStruct((B, 1), jnp.float32),
        grid_spec=pltpu.PrefetchScalarGridSpec(
            num_scalar_prefetch=0,
            grid=grid,
            in_specs=[
                pl.BlockSpec((tb, size), lambda i: (i, 0)),   # batch-tiled x stream
                full(w1), full(b1),                           # resident weights
                full(w2), full(b2),                           # (tiny -> default
                full(w3_row),                                 #  buffering is fine)
                smem, smem, smem,                             # a1, a2, b3 scalars
            ],
            out_specs=pl.BlockSpec((tb, 1), lambda i: (i, 0)),
        ),
        compiler_params=pltpu.CompilerParams(
            dimension_semantics=("parallel",),     # megacore shards batch on v7x
            vmem_limit_bytes=32 << 20,             # v5e scoped default (16 MiB) not the gate
        ),
    )(x, w1, b1, w2, b2, w3_row, a1, a2, b3)


def init_params(key, size):
    """Mirror nn.Linear (uniform +-1/sqrt(fan_in)) and nn.PReLU (slope=0.25).
    w1/w2 stored [in, out]; w3 stored as a (1, 32) row for the VPU reduce;
    b3 and the PReLU slopes are SMEM scalars."""
    ks = jax.random.split(key, 6)

    def linear_init(kw, kb, fan_in, fan_out):
        bound = 1.0 / (fan_in ** 0.5)
        w = jax.random.uniform(kw, (fan_in, fan_out), jnp.float32, -bound, bound)
        b = jax.random.uniform(kb, (1, fan_out), jnp.float32, -bound, bound)
        return w, b

    w1, b1 = linear_init(ks[0], ks[1], size, 64)
    w2, b2 = linear_init(ks[2], ks[3], 64, 32)
    w3, b3_row = linear_init(ks[4], ks[5], 32, 1)
    w3_row = w3.T                                   # (1, 32)
    b3 = b3_row.reshape((1,))                       # scalar bias
    a1 = jnp.full((1,), 0.25, jnp.float32)
    a2 = jnp.full((1,), 0.25, jnp.float32)
    return (w1, b1, w2, b2, w3_row, a1, a2, b3)


def reference_forward(x, params):
    w1, b1, w2, b2, w3_row, a1, a2, b3 = params
    hi = jax.lax.Precision.HIGHEST
    h = jnp.dot(x, w1, precision=hi) + b1
    h = jnp.where(h >= 0, h, a1[0] * h)
    h = jnp.dot(h, w2, precision=hi) + b2
    h = jnp.where(h >= 0, h, a2[0] * h)
    return jnp.dot(h, w3_row.T, precision=hi) + b3[0]


if __name__ == "__main__":
    key = jax.random.PRNGKey(0)
    k_x, k_p, k_x2 = jax.random.split(key, 3)

    B, size = 256, 32
    x = jax.random.normal(k_x, (B, size), jnp.float32)
    params = init_params(k_p, size)
    ref = reference_forward(x, params)

    # f32 path (tight tolerance).
    out = jax.block_until_ready(mlp_forward(x, params, compute_dtype=None))
    assert out.shape == (B, 1)
    assert jnp.allclose(out, ref, atol=1e-5, rtol=1e-4), "f32 mismatch vs reference"

    # Default path (bf16 x/w streaming on v6e/v7x) -- looser tolerance.
    out_auto = jax.block_until_ready(mlp_forward(x, params))
    assert jnp.allclose(out_auto, ref, atol=5e-2, rtol=5e-2), "auto/bf16 mismatch"

    # Partial trailing tile (B % tb != 0) exercises Pallas masking explicitly.
    B2 = 320
    x2 = jax.random.normal(k_x2, (B2, size), jnp.float32)
    out2 = jax.block_until_ready(mlp_forward(x2, params, tb=128, compute_dtype=None))
    ref2 = reference_forward(x2, params)
    assert out2.shape == (B2, 1)
    assert jnp.allclose(out2, ref2, atol=1e-5, rtol=1e-4), "partial-tile mismatch"

    print("KERNEL_OK")
</pallas_src>

<mosaic_0001>
module attributes {stable_mosaic.version = 11 : i64} {
  func.func @mlp_kernel(%arg0: i32, %arg1: memref<256x32xf32, #tpu.memory_space<vmem>>, %arg2: memref<32x64xf32, #tpu.memory_space<vmem>>, %arg3: memref<1x64xf32, #tpu.memory_space<vmem>>, %arg4: memref<64x32xf32, #tpu.memory_space<vmem>>, %arg5: memref<1x32xf32, #tpu.memory_space<vmem>>, %arg6: memref<1x32xf32, #tpu.memory_space<vmem>>, %arg7: memref<1xf32, #tpu.memory_space<smem>>, %arg8: memref<1xf32, #tpu.memory_space<smem>>, %arg9: memref<1xf32, #tpu.memory_space<smem>>, %arg10: memref<256x1xf32, #tpu.memory_space<vmem>>) attributes {dimension_semantics = [#tpu.dimension_semantics<parallel>], iteration_bounds = array<i64: 1>, scalar_prefetch = 0 : i64, scratch_operands = 0 : i64, tpu.core_type = #tpu.core_type<tc>, window_params = [{transform_indices = @transform_0, window_bounds = array<i64: 256, 32>}, {pipeline_mode = #tpu.pipeline_mode<synchronous>, transform_indices = @transform_1, window_bounds = array<i64: 32, 64>}, {pipeline_mode = #tpu.pipeline_mode<synchronous>, transform_indices = @transform_2, window_bounds = array<i64: 1, 64>}, {pipeline_mode = #tpu.pipeline_mode<synchronous>, transform_indices = @transform_3, window_bounds = array<i64: 64, 32>}, {pipeline_mode = #tpu.pipeline_mode<synchronous>, transform_indices = @transform_4, window_bounds = array<i64: 1, 32>}, {pipeline_mode = #tpu.pipeline_mode<synchronous>, transform_indices = @transform_5, window_bounds = array<i64: 1, 32>}, {transform_indices = @transform_6, window_bounds = array<i64: 1>}, {transform_indices = @transform_7, window_bounds = array<i64: 1>}, {transform_indices = @transform_8, window_bounds = array<i64: 1>}, {transform_indices = @transform_9, window_bounds = array<i64: 256, 1>}]} {
    %c0 = arith.constant 0 : index
    %c0_0 = arith.constant 0 : index
    %0 = vector.load %arg1[%c0, %c0_0] : memref<256x32xf32, #tpu.memory_space<vmem>>, vector<256x32xf32>
    %c0_1 = arith.constant 0 : index
    %c0_2 = arith.constant 0 : index
    %1 = vector.load %arg2[%c0_1, %c0_2] : memref<32x64xf32, #tpu.memory_space<vmem>>, vector<32x64xf32>
    %cst = arith.constant dense<0.000000e+00> : vector<256x64xf32>
    %2 = tpu.matmul %0, %1, %cst {dimension_numbers = #tpu.dot_dimension_numbers<[1], [0], [0], [1], [0, 0, 1, 1], [], []>} : vector<256x32xf32>, vector<32x64xf32>, vector<256x64xf32> -> vector<256x64xf32>
    %c0_3 = arith.constant 0 : index
    %c0_4 = arith.constant 0 : index
    %3 = vector.load %arg3[%c0_3, %c0_4] : memref<1x64xf32, #tpu.memory_space<vmem>>, vector<1x64xf32>
    %4 = vector.broadcast %3 : vector<1x64xf32> to vector<256x64xf32>
    %5 = arith.addf %2, %4 : vector<256x64xf32>
    %cst_5 = arith.constant 0.000000e+00 : f32
    %6 = vector.broadcast %cst_5 : f32 to vector<256x64xf32>
    %7 = arith.cmpf oge, %5, %6 : vector<256x64xf32>
    %c0_6 = arith.constant 0 : index
    %8 = memref.load %arg7[%c0_6] : memref<1xf32, #tpu.memory_space<smem>>
    %9 = vector.broadcast %8 : f32 to vector<256x64xf32>
    %10 = arith.mulf %9, %5 : vector<256x64xf32>
    %11 = arith.select %7, %5, %10 : vector<256x64xi1>, vector<256x64xf32>
    %c0_7 = arith.constant 0 : index
    %c0_8 = arith.constant 0 : index
    %12 = vector.load %arg4[%c0_7, %c0_8] : memref<64x32xf32, #tpu.memory_space<vmem>>, vector<64x32xf32>
    %cst_9 = arith.constant dense<0.000000e+00> : vector<256x32xf32>
    %13 = tpu.matmul %11, %12, %cst_9 {dimension_numbers = #tpu.dot_dimension_numbers<[1], [0], [0], [1], [0, 0, 1, 1], [], []>} : vector<256x64xf32>, vector<64x32xf32>, vector<256x32xf32> -> vector<256x32xf32>
    %c0_10 = arith.constant 0 : index
    %c0_11 = arith.constant 0 : index
    %14 = vector.load %arg5[%c0_10, %c0_11] : memref<1x32xf32, #tpu.memory_space<vmem>>, vector<1x32xf32>
    %15 = vector.broadcast %14 : vector<1x32xf32> to vector<256x32xf32>
    %16 = arith.addf %13, %15 : vector<256x32xf32>
    %cst_12 = arith.constant 0.000000e+00 : f32
    %17 = vector.broadcast %cst_12 : f32 to vector<256x32xf32>
    %18 = arith.cmpf oge, %16, %17 : vector<256x32xf32>
    %c0_13 = arith.constant 0 : index
    %19 = memref.load %arg8[%c0_13] : memref<1xf32, #tpu.memory_space<smem>>
    %20 = vector.broadcast %19 : f32 to vector<256x32xf32>
    %21 = arith.mulf %20, %16 : vector<256x32xf32>
    %22 = arith.select %18, %16, %21 : vector<256x32xi1>, vector<256x32xf32>
    %c0_14 = arith.constant 0 : index
    %c0_15 = arith.constant 0 : index
    %23 = vector.load %arg6[%c0_14, %c0_15] : memref<1x32xf32, #tpu.memory_space<vmem>>, vector<1x32xf32>
    %24 = vector.broadcast %23 : vector<1x32xf32> to vector<256x32xf32>
    %25 = arith.mulf %22, %24 : vector<256x32xf32>
    %cst_16 = arith.constant dense<0.000000e+00> : vector<256xf32>
    %26 = vector.multi_reduction <add>, %25, %cst_16 [1] : vector<256x32xf32> to vector<256xf32>
    %27 = vector.shape_cast %26 : vector<256xf32> to vector<256x1xf32>
    %c0_17 = arith.constant 0 : index
    %28 = memref.load %arg9[%c0_17] : memref<1xf32, #tpu.memory_space<smem>>
    %29 = vector.broadcast %28 : f32 to vector<256x1xf32>
    %30 = arith.addf %27, %29 : vector<256x1xf32>
    %c0_18 = arith.constant 0 : index
    %c0_19 = arith.constant 0 : index
    %31 = vector.load %arg10[%c0_18, %c0_19] : memref<256x1xf32, #tpu.memory_space<vmem>>, vector<256x1xf32>
    tpu.vector_store %arg10[%c0_18, %c0_19], %30 {strides = array<i32>} : memref<256x1xf32, #tpu.memory_space<vmem>>, vector<256x1xf32>,
    return
  }
  func.func @transform_0(%arg0: i32) -> (i32, i32) {
    %c0_i32 = arith.constant 0 : i32
    %c0_i32_0 = arith.constant 0 : i32
    return %arg0, %c0_i32 : i32, i32
  }
  func.func @transform_1(%arg0: i32) -> (i32, i32) {
    %c0_i32 = arith.constant 0 : i32
    %c0_i32_0 = arith.constant 0 : i32
    %c0_i32_1 = arith.constant 0 : i32
    return %c0_i32, %c0_i32_0 : i32, i32
  }
  func.func @transform_2(%arg0: i32) -> (i32, i32) {
    %c0_i32 = arith.constant 0 : i32
    %c0_i32_0 = arith.constant 0 : i32
    %c0_i32_1 = arith.constant 0 : i32
    return %c0_i32, %c0_i32_0 : i32, i32
  }
  func.func @transform_3(%arg0: i32) -> (i32, i32) {
    %c0_i32 = arith.constant 0 : i32
    %c0_i32_0 = arith.constant 0 : i32
    %c0_i32_1 = arith.constant 0 : i32
    return %c0_i32, %c0_i32_0 : i32, i32
  }
  func.func @transform_4(%arg0: i32) -> (i32, i32) {
    %c0_i32 = arith.constant 0 : i32
    %c0_i32_0 = arith.constant 0 : i32
    %c0_i32_1 = arith.constant 0 : i32
    return %c0_i32, %c0_i32_0 : i32, i32
  }
  func.func @transform_5(%arg0: i32) -> (i32, i32) {
    %c0_i32 = arith.constant 0 : i32
    %c0_i32_0 = arith.constant 0 : i32
    %c0_i32_1 = arith.constant 0 : i32
    return %c0_i32, %c0_i32_0 : i32, i32
  }
  func.func @transform_6(%arg0: i32) -> i32 {
    %c0_i32 = arith.constant 0 : i32
    %c0_i32_0 = arith.constant 0 : i32
    return %c0_i32 : i32
  }
  func.func @transform_7(%arg0: i32) -> i32 {
    %c0_i32 = arith.constant 0 : i32
    %c0_i32_0 = arith.constant 0 : i32
    return %c0_i32 : i32
  }
  func.func @transform_8(%arg0: i32) -> i32 {
    %c0_i32 = arith.constant 0 : i32
    %c0_i32_0 = arith.constant 0 : i32
    return %c0_i32 : i32
  }
  func.func @transform_9(%arg0: i32) -> (i32, i32) {
    %c0_i32 = arith.constant 0 : i32
    %c0_i32_0 = arith.constant 0 : i32
    return %arg0, %c0_i32 : i32, i32
  }
}

</mosaic_0001>

<llo_original>
// kernel: tpu_custom_call.1
$region0: #{tpu_custom_call.1}
  #allocation0 [shape = 'u32[]', space=smem, size = 0x4, offset = 0x4, fixed_abs, tag = 'smem constant byte address 0x4 - core index']
  #allocation1 [shape = 'u32[144,128]{1,0:T(1,128)}', space=vmem, size = 0x12000, scoped, tag = 'internal scratch']
  #allocation2 [shape = 'f32[1]{0:T(128)S(6)}', space=smem, size = 0x200, scoped, tag = 'scoped memory for tpu_custom_call.1']
  #allocation3 [shape = 'f32[1]{0:T(128)S(6)}', space=smem, size = 0x200, scoped, tag = 'scoped memory for tpu_custom_call.1']
  #allocation4 [shape = 'f32[1]{0:T(128)S(6)}', space=smem, size = 0x200, scoped, tag = 'scoped memory for tpu_custom_call.1']
  %s0 = inlined_call_operand.vmem [shape: f32[256,32], index: 0, kind: input, shape index: {}]
  %s1 = inlined_call_operand.vmem [shape: f32[32,64], index: 1, kind: input, shape index: {}]
  %s2 = inlined_call_operand.vmem [shape: f32[1,64], index: 2, kind: input, shape index: {}]
  %s3 = inlined_call_operand.vmem [shape: f32[64,32], index: 3, kind: input, shape index: {}]
  %s4 = inlined_call_operand.vmem [shape: f32[1,32], index: 4, kind: input, shape index: {}]
  %s5 = inlined_call_operand.vmem [shape: f32[1,32], index: 5, kind: input, shape index: {}]
  %s6 = inlined_call_operand.<no memory space> [shape: f32[1], index: 6, kind: input, shape index: {}]
  %s7 = inlined_call_operand.<no memory space> [shape: f32[1], index: 7, kind: input, shape index: {}]
  %s8 = inlined_call_operand.<no memory space> [shape: f32[1], index: 8, kind: input, shape index: {}]
  %s9 = inlined_call_operand.vmem [shape: f32[256,1], index: 9, kind: output, shape index: {}]
  %s10 = sld [smem:[#allocation0]]
  $region46: #{tpu_custom_call.1} parent=0
    _
  %s12 = ssub.s32 1, %s10
  %s13 = scalar_select 0, %s12, %s10
  %14 = sst [smem:[#allocation2]] %s6
  %15 = sst [smem:[#allocation3]] %s7
  %16 = sst [smem:[#allocation4]] %s8
  // Predicated region
  $region2: #{tpu_custom_call.1} parent=0 // pred_check
    _
  $region3: #{tpu_custom_call.1} parent=0 // pred_check_branch
    %18 = sbr.rel (0) target = $region5
  $region4: #{tpu_custom_call.1} parent=0 // pred_region
    _
  $region5: #{tpu_custom_call.1} parent=0 // pred_fallthru
    _
  // Predicated region
  $region6: #{tpu_custom_call.1} parent=0 // pred_check
    _
  $region7: #{tpu_custom_call.1} parent=0 // pred_check_branch
    %20 = sbr.rel (0) target = $region9
  $region8: #{tpu_custom_call.1} parent=0 // pred_region
    _
  $region9: #{tpu_custom_call.1} parent=0 // pred_fallthru
    _
  // Predicated region
  $region10: #{tpu_custom_call.1} parent=0 // pred_check
    _
  $region11: #{tpu_custom_call.1} parent=0 // pred_check_branch
    %22 = sbr.rel (0) target = $region13
  $region12: #{tpu_custom_call.1} parent=0 // pred_region
    _
  $region13: #{tpu_custom_call.1} parent=0 // pred_fallthru
    _
  // Predicated region
  $region14: #{tpu_custom_call.1} parent=0 // pred_check
    _
  $region15: #{tpu_custom_call.1} parent=0 // pred_check_branch
    %24 = sbr.rel (0) target = $region17
  $region16: #{tpu_custom_call.1} parent=0 // pred_region
    _
  $region17: #{tpu_custom_call.1} parent=0 // pred_fallthru
    _
  // Predicated region
  $region18: #{tpu_custom_call.1} parent=0 // pred_check
    _
  $region19: #{tpu_custom_call.1} parent=0 // pred_check_branch
    %26 = sbr.rel (0) target = $region21
  $region20: #{tpu_custom_call.1} parent=0 // pred_region
    _
  $region21: #{tpu_custom_call.1} parent=0 // pred_fallthru
    _
  // Predicated region
  $region22: #{tpu_custom_call.1} parent=0 // pred_check
    _
  $region23: #{tpu_custom_call.1} parent=0 // pred_check_branch
    %28 = sbr.rel (0) target = $region25
  $region24: #{tpu_custom_call.1} parent=0 // pred_region
    _
  $region25: #{tpu_custom_call.1} parent=0 // pred_fallthru
    _
  // Predicated region
  $region26: #{tpu_custom_call.1} parent=0 // pred_check
    _
  $region27: #{tpu_custom_call.1} parent=0 // pred_check_branch
    %30 = sbr.rel (0) target = $region29
  $region28: #{tpu_custom_call.1} parent=0 // pred_region
    _
  $region29: #{tpu_custom_call.1} parent=0 // pred_fallthru
    _
  // Predicated region
  $region30: #{tpu_custom_call.1} parent=0 // pred_check
    _
  $region31: #{tpu_custom_call.1} parent=0 // pred_check_branch
    %32 = sbr.rel (0) target = $region33
  $region32: #{tpu_custom_call.1} parent=0 // pred_region
    _
  $region33: #{tpu_custom_call.1} parent=0 // pred_fallthru
    _
  // Predicated region
  $region34: #{tpu_custom_call.1} parent=0 // pred_check
    _
  $region35: #{tpu_custom_call.1} parent=0 // pred_check_branch
    %34 = sbr.rel (0) target = $region37
  $region36: #{tpu_custom_call.1} parent=0 // pred_region
    _
  $region37: #{tpu_custom_call.1} parent=0 // pred_fallthru
    _
  %v35 = vld [vmem:[%s0] sm:$0xff]
  %v36 = vld [vmem:[%s0 + $0x8] sm:$0xff]
  %v37 = vld [vmem:[%s0 + $0x10] sm:$0xff]
  %v38 = vld [vmem:[%s0 + $0x18] sm:$0xff]
  %v39 = vld [vmem:[%s0 + $0x20] sm:$0xff]
  %v40 = vld [vmem:[%s0 + $0x28] sm:$0xff]
  %v41 = vld [vmem:[%s0 + $0x30] sm:$0xff]
  %v42 = vld [vmem:[%s0 + $0x38] sm:$0xff]
  %v43 = vld [vmem:[%s0 + $0x40] sm:$0xff]
  %v44 = vld [vmem:[%s0 + $0x48] sm:$0xff]
  %v45 = vld [vmem:[%s0 + $0x50] sm:$0xff]
  %v46 = vld [vmem:[%s0 + $0x58] sm:$0xff]
  %v47 = vld [vmem:[%s0 + $0x60] sm:$0xff]
  %v48 = vld [vmem:[%s0 + $0x68] sm:$0xff]
  %v49 = vld [vmem:[%s0 + $0x70] sm:$0xff]
  %v50 = vld [vmem:[%s0 + $0x78] sm:$0xff]
  %v51 = vld [vmem:[%s0 + $0x80] sm:$0xff]
  %v52 = vld [vmem:[%s0 + $0x88] sm:$0xff]
  %v53 = vld [vmem:[%s0 + $0x90] sm:$0xff]
  %v54 = vld [vmem:[%s0 + $0x98] sm:$0xff]
  %v55 = vld [vmem:[%s0 + $0xa0] sm:$0xff]
  %v56 = vld [vmem:[%s0 + $0xa8] sm:$0xff]
  %v57 = vld [vmem:[%s0 + $0xb0] sm:$0xff]
  %v58 = vld [vmem:[%s0 + $0xb8] sm:$0xff]
  %v59 = vld [vmem:[%s0 + $0xc0] sm:$0xff]
  %v60 = vld [vmem:[%s0 + $0xc8] sm:$0xff]
  %v61 = vld [vmem:[%s0 + $0xd0] sm:$0xff]
  %v62 = vld [vmem:[%s0 + $0xd8] sm:$0xff]
  %v63 = vld [vmem:[%s0 + $0xe0] sm:$0xff]
  %v64 = vld [vmem:[%s0 + $0xe8] sm:$0xff]
  %v65 = vld [vmem:[%s0 + $0xf0] sm:$0xff]
  %v66 = vld [vmem:[%s0 + $0xf8] sm:$0xff]
  %v67 = vld [vmem:[%s1] sm:$0xff]
  %v68 = vld [vmem:[%s1 + $0x8] sm:$0xff]
  %v69 = vld [vmem:[%s1 + $0x10] sm:$0xff]
  %v70 = vld [vmem:[%s1 + $0x18] sm:$0xff]
  %v71 = vld [vmem:[%s2] sm:$0x1]
  %v73 = vlaneseq
  %v74 = vshrl.u32 %v73, 7
  %v75 = vsub.s32 0, %v74
  %v76 = vrot.slane %v71, %v75
  %vm78 = vcmask 261120
  %v80 = vsel %vm78, %v35, 0
  %v83 = vsel %vm78, %v36, 0
  %v86 = vsel %vm78, %v37, 0
  %v89 = vsel %vm78, %v38, 0
  %v92 = vsel %vm78, %v39, 0
  %v95 = vsel %vm78, %v40, 0
  %v98 = vsel %vm78, %v41, 0
  %v101 = vsel %vm78, %v42, 0
  %v104 = vsel %vm78, %v43, 0
  %v107 = vsel %vm78, %v44, 0
  %v110 = vsel %vm78, %v45, 0
  %v113 = vsel %vm78, %v46, 0
  %v116 = vsel %vm78, %v47, 0
  %v119 = vsel %vm78, %v48, 0
  %v122 = vsel %vm78, %v49, 0
  %v125 = vsel %vm78, %v50, 0
  %v128 = vsel %vm78, %v51, 0
  %v131 = vsel %vm78, %v52, 0
  %v134 = vsel %vm78, %v53, 0
  %v137 = vsel %vm78, %v54, 0
  %v140 = vsel %vm78, %v55, 0
  %v143 = vsel %vm78, %v56, 0
  %v146 = vsel %vm78, %v57, 0
  %v149 = vsel %vm78, %v58, 0
  %v152 = vsel %vm78, %v59, 0
  %v155 = vsel %vm78, %v60, 0
  %v158 = vsel %vm78, %v61, 0
  %v161 = vsel %vm78, %v62, 0
  %v164 = vsel %vm78, %v63, 0
  %v167 = vsel %vm78, %v64, 0
  %v170 = vsel %vm78, %v65, 0
  %v173 = vsel %vm78, %v66, 0
  %175 = vmatprep.subr.mxu0 0.0
  %176 = vmatpush1.msra.mxu0 0.0
  %177 = vmatprep.subr.mxu0 0.0
  %178 = vmatpush1.msra.mxu0 0.0
  %179 = vmatprep.subr.mxu0 0.0
  %180 = vmatpush1.msra.mxu0 0.0
  %181 = vmatprep.subr.mxu0 0.0
  %182 = vmatpush1.msra.mxu0 0.0
  %183 = vmatprep.subr.mxu0 0.0
  %184 = vmatpush1.msra.mxu0 0.0
  %185 = vmatprep.subr.mxu0 0.0
  %186 = vmatpush1.msra.mxu0 0.0
  %187 = vmatprep.subr.mxu0 0.0
  %188 = vmatpush1.msra.mxu0 0.0
  %189 = vmatprep.subr.mxu0 0.0
  %190 = vmatpush1.msra.mxu0 0.0
  %191 = vmatprep.subr.mxu0 0.0
  %192 = vmatpush1.msra.mxu0 0.0
  %193 = vmatprep.subr.mxu0 0.0
  %194 = vmatpush1.msra.mxu0 0.0
  %195 = vmatprep.subr.mxu0 0.0
  %196 = vmatpush1.msra.mxu0 0.0
  %197 = vmatprep.subr.mxu0 0.0
  %198 = vmatpush1.msra.mxu0 0.0
  %199 = vmatprep.subr.mxu0 0.0
  %200 = vmatpush1.msra.mxu0 %v70
  %201 = vmatprep.subr.mxu0 0.0
  %202 = vmatpush1.msra.mxu0 %v69
  %203 = vmatprep.subr.mxu0 0.0
  %204 = vmatpush1.msra.mxu0 %v68
  %205 = vmatprep.subr.mxu0 0.0
  %206 = vmatpush1.msra.mxu0 %v67
  %207 = vmatprep.subr.mxu0 0.0
  %208 = vmatpush2.msra.mxu0 0.0
  %209 = vmatprep.subr.mxu0 0.0
  %210 = vmatpush2.msra.mxu0 0.0
  %211 = vmatprep.subr.mxu0 0.0
  %212 = vmatpush2.msra.mxu0 0.0
  %213 = vmatprep.subr.mxu0 0.0
  %214 = vmatpush2.msra.mxu0 0.0
  %215 = vmatprep.subr.mxu0 0.0
  %216 = vmatpush2.msra.mxu0 0.0
  %217 = vmatprep.subr.mxu0 0.0
  %218 = vmatpush2.msra.mxu0 0.0
  %219 = vmatprep.subr.mxu0 0.0
  %220 = vmatpush2.msra.mxu0 0.0
  %221 = vmatprep.subr.mxu0 0.0
  %222 = vmatpush2.msra.mxu0 0.0
  %223 = vmatprep.subr.mxu0 0.0
  %224 = vmatpush2.msra.mxu0 0.0
  %225 = vmatprep.subr.mxu0 0.0
  %226 = vmatpush2.msra.mxu0 0.0
  %227 = vmatprep.subr.mxu0 0.0
  %228 = vmatpush2.msra.mxu0 0.0
  %229 = vmatprep.subr.mxu0 0.0
  %230 = vmatpush2.msra.mxu0 0.0
  %231 = vmatprep.subr.mxu0 0.0
  %232 = vmatpush2.msra.mxu0 0.0
  %233 = vmatprep.subr.mxu0 0.0
  %234 = vmatpush2.msra.mxu0 0.0
  %235 = vmatprep.subr.mxu0 0.0
  %236 = vmatpush2.msra.mxu0 0.0
  %237 = vmatprep.subr.mxu0 0.0
  %238 = vmatpush2.msra.mxu0 0.0
  %239 = vmatprep.mubr.f32.mxu0 0.0
  %240 = vmatmul.mubr.f32.gmra.mxu0 %v80
  %v241 = vpop.f32.mrf.mxu0
  %v242 = vadd.f32 %v76, %v241
  %v243 = vpop.f32.mrf.mxu0
  %244 = vmatprep.mubr.f32.mxu0 0.0
  %245 = vmatmul.mubr.f32.gmra.mxu0 %v83
  %v246 = vpop.f32.mrf.mxu0
  %v247 = vadd.f32 %v76, %v246
  %v248 = vpop.f32.mrf.mxu0
  %249 = vmatprep.mubr.f32.mxu0 0.0
  %250 = vmatmul.mubr.f32.gmra.mxu0 %v86
  %v251 = vpop.f32.mrf.mxu0
  %v252 = vadd.f32 %v76, %v251
  %v253 = vpop.f32.mrf.mxu0
  %254 = vmatprep.mubr.f32.mxu0 0.0
  %255 = vmatmul.mubr.f32.gmra.mxu0 %v89
  %v256 = vpop.f32.mrf.mxu0
  %v257 = vadd.f32 %v76, %v256
  %v258 = vpop.f32.mrf.mxu0
  %259 = vmatprep.mubr.f32.mxu0 0.0
  %260 = vmatmul.mubr.f32.gmra.mxu0 %v92
  %v261 = vpop.f32.mrf.mxu0
  %v262 = vadd.f32 %v76, %v261
  %v263 = vpop.f32.mrf.mxu0
  %264 = vmatprep.mubr.f32.mxu0 0.0
  %265 = vmatmul.mubr.f32.gmra.mxu0 %v95
  %v266 = vpop.f32.mrf.mxu0
  %v267 = vadd.f32 %v76, %v266
  %v268 = vpop.f32.mrf.mxu0
  %269 = vmatprep.mubr.f32.mxu0 0.0
  %270 = vmatmul.mubr.f32.gmra.mxu0 %v98
  %v271 = vpop.f32.mrf.mxu0
  %v272 = vadd.f32 %v76, %v271
  %v273 = vpop.f32.mrf.mxu0
  %274 = vmatprep.mubr.f32.mxu0 0.0
  %275 = vmatmul.mubr.f32.gmra.mxu0 %v101
  %v276 = vpop.f32.mrf.mxu0
  %v277 = vadd.f32 %v76, %v276
  %v278 = vpop.f32.mrf.mxu0
  %279 = vmatprep.mubr.f32.mxu0 0.0
  %280 = vmatmul.mubr.f32.gmra.mxu0 %v104
  %v281 = vpop.f32.mrf.mxu0
  %v282 = vadd.f32 %v76, %v281
  %v283 = vpop.f32.mrf.mxu0
  %284 = vmatprep.mubr.f32.mxu0 0.0
  %285 = vmatmul.mubr.f32.gmra.mxu0 %v107
  %v286 = vpop.f32.mrf.mxu0
  %v287 = vadd.f32 %v76, %v286
  %v288 = vpop.f32.mrf.mxu0
  %289 = vmatprep.mubr.f32.mxu0 0.0
  %290 = vmatmul.mubr.f32.gmra.mxu0 %v110
  %v291 = vpop.f32.mrf.mxu0
  %v292 = vadd.f32 %v76, %v291
  %v293 = vpop.f32.mrf.mxu0
  %294 = vmatprep.mubr.f32.mxu0 0.0
  %295 = vmatmul.mubr.f32.gmra.mxu0 %v113
  %v296 = vpop.f32.mrf.mxu0
  %v297 = vadd.f32 %v76, %v296
  %v298 = vpop.f32.mrf.mxu0
  %299 = vmatprep.mubr.f32.mxu0 0.0
  %300 = vmatmul.mubr.f32.gmra.mxu0 %v116
  %v301 = vpop.f32.mrf.mxu0
  %v302 = vadd.f32 %v76, %v301
  %v303 = vpop.f32.mrf.mxu0
  %304 = vmatprep.mubr.f32.mxu0 0.0
  %305 = vmatmul.mubr.f32.gmra.mxu0 %v119
  %v306 = vpop.f32.mrf.mxu0
  %v307 = vadd.f32 %v76, %v306
  %v308 = vpop.f32.mrf.mxu0
  %309 = vmatprep.mubr.f32.mxu0 0.0
  %310 = vmatmul.mubr.f32.gmra.mxu0 %v122
  %v311 = vpop.f32.mrf.mxu0
  %v312 = vadd.f32 %v76, %v311
  %v313 = vpop.f32.mrf.mxu0
  %314 = vmatprep.mubr.f32.mxu0 0.0
  %315 = vmatmul.mubr.f32.gmra.mxu0 %v125
  %v316 = vpop.f32.mrf.mxu0
  %v317 = vadd.f32 %v76, %v316
  %v318 = vpop.f32.mrf.mxu0
  %319 = vmatprep.mubr.f32.mxu0 0.0
  %320 = vmatmul.mubr.f32.gmra.mxu0 %v128
  %v321 = vpop.f32.mrf.mxu0
  %v322 = vadd.f32 %v76, %v321
  %v323 = vpop.f32.mrf.mxu0
  %324 = vmatprep.mubr.f32.mxu0 0.0
  %325 = vmatmul.mubr.f32.gmra.mxu0 %v131
  %v326 = vpop.f32.mrf.mxu0
  %v327 = vadd.f32 %v76, %v326
  %v328 = vpop.f32.mrf.mxu0
  %329 = vmatprep.mubr.f32.mxu0 0.0
  %330 = vmatmul.mubr.f32.gmra.mxu0 %v134
  %v331 = vpop.f32.mrf.mxu0
  %v332 = vadd.f32 %v76, %v331
  %v333 = vpop.f32.mrf.mxu0
  %334 = vmatprep.mubr.f32.mxu0 0.0
  %335 = vmatmul.mubr.f32.gmra.mxu0 %v137
  %v336 = vpop.f32.mrf.mxu0
  %v337 = vadd.f32 %v76, %v336
  %v338 = vpop.f32.mrf.mxu0
  %339 = vmatprep.mubr.f32.mxu0 0.0
  %340 = vmatmul.mubr.f32.gmra.mxu0 %v140
  %v341 = vpop.f32.mrf.mxu0
  %v342 = vadd.f32 %v76, %v341
  %v343 = vpop.f32.mrf.mxu0
  %344 = vmatprep.mubr.f32.mxu0 0.0
  %345 = vmatmul.mubr.f32.gmra.mxu0 %v143
  %v346 = vpop.f32.mrf.mxu0
  %v347 = vadd.f32 %v76, %v346
  %v348 = vpop.f32.mrf.mxu0
  %349 = vmatprep.mubr.f32.mxu0 0.0
  %350 = vmatmul.mubr.f32.gmra.mxu0 %v146
  %v351 = vpop.f32.mrf.mxu0
  %v352 = vadd.f32 %v76, %v351
  %v353 = vpop.f32.mrf.mxu0
  %354 = vmatprep.mubr.f32.mxu0 0.0
  %355 = vmatmul.mubr.f32.gmra.mxu0 %v149
  %v356 = vpop.f32.mrf.mxu0
  %v357 = vadd.f32 %v76, %v356
  %v358 = vpop.f32.mrf.mxu0
  %359 = vmatprep.mubr.f32.mxu0 0.0
  %360 = vmatmul.mubr.f32.gmra.mxu0 %v152
  %v361 = vpop.f32.mrf.mxu0
  %v362 = vadd.f32 %v76, %v361
  %v363 = vpop.f32.mrf.mxu0
  %364 = vmatprep.mubr.f32.mxu0 0.0
  %365 = vmatmul.mubr.f32.gmra.mxu0 %v155
  %v366 = vpop.f32.mrf.mxu0
  %v367 = vadd.f32 %v76, %v366
  %v368 = vpop.f32.mrf.mxu0
  %369 = vmatprep.mubr.f32.mxu0 0.0
  %370 = vmatmul.mubr.f32.gmra.mxu0 %v158
  %v371 = vpop.f32.mrf.mxu0
  %v372 = vadd.f32 %v76, %v371
  %v373 = vpop.f32.mrf.mxu0
  %374 = vmatprep.mubr.f32.mxu0 0.0
  %375 = vmatmul.mubr.f32.gmra.mxu0 %v161
  %v376 = vpop.f32.mrf.mxu0
  %v377 = vadd.f32 %v76, %v376
  %v378 = vpop.f32.mrf.mxu0
  %379 = vmatprep.mubr.f32.mxu0 0.0
  %380 = vmatmul.mubr.f32.gmra.mxu0 %v164
  %v381 = vpop.f32.mrf.mxu0
  %v382 = vadd.f32 %v76, %v381
  %v383 = vpop.f32.mrf.mxu0
  %384 = vmatprep.mubr.f32.mxu0 0.0
  %385 = vmatmul.mubr.f32.gmra.mxu0 %v167
  %v386 = vpop.f32.mrf.mxu0
  %v387 = vadd.f32 %v76, %v386
  %v388 = vpop.f32.mrf.mxu0
  %389 = vmatprep.mubr.f32.mxu0 0.0
  %390 = vmatmul.mubr.f32.gmra.mxu0 %v170
  %v391 = vpop.f32.mrf.mxu0
  %v392 = vadd.f32 %v76, %v391
  %v393 = vpop.f32.mrf.mxu0
  %394 = vmatprep.mubr.f32.mxu0 0.0
  %395 = vmatmul.mubr.f32.gmra.mxu0 %v173
  %v396 = vpop.f32.mrf.mxu0
  %v397 = vadd.f32 %v76, %v396
  %v398 = vpop.f32.mrf.mxu0
  %399 = vdwg.mxu0
  %vm400 = vcmp.ge.f32.partialorder %v242, 0.0
  %vm401 = vcmp.ge.f32.partialorder %v247, 0.0
  %vm402 = vcmp.ge.f32.partialorder %v252, 0.0
  %vm403 = vcmp.ge.f32.partialorder %v257, 0.0
  %vm404 = vcmp.ge.f32.partialorder %v262, 0.0
  %vm405 = vcmp.ge.f32.partialorder %v267, 0.0
  %vm406 = vcmp.ge.f32.partialorder %v272, 0.0
  %vm407 = vcmp.ge.f32.partialorder %v277, 0.0
  %vm408 = vcmp.ge.f32.partialorder %v282, 0.0
  %vm409 = vcmp.ge.f32.partialorder %v287, 0.0
  %vm410 = vcmp.ge.f32.partialorder %v292, 0.0
  %vm411 = vcmp.ge.f32.partialorder %v297, 0.0
  %vm412 = vcmp.ge.f32.partialorder %v302, 0.0
  %vm413 = vcmp.ge.f32.partialorder %v307, 0.0
  %vm414 = vcmp.ge.f32.partialorder %v312, 0.0
  %vm415 = vcmp.ge.f32.partialorder %v317, 0.0
  %vm416 = vcmp.ge.f32.partialorder %v322, 0.0
  %vm417 = vcmp.ge.f32.partialorder %v327, 0.0
  %vm418 = vcmp.ge.f32.partialorder %v332, 0.0
  %vm419 = vcmp.ge.f32.partialorder %v337, 0.0
  %vm420 = vcmp.ge.f32.partialorder %v342, 0.0
  %vm421 = vcmp.ge.f32.partialorder %v347, 0.0
  %vm422 = vcmp.ge.f32.partialorder %v352, 0.0
  %vm423 = vcmp.ge.f32.partialorder %v357, 0.0
  %vm424 = vcmp.ge.f32.partialorder %v362, 0.0
  %vm425 = vcmp.ge.f32.partialorder %v367, 0.0
  %vm426 = vcmp.ge.f32.partialorder %v372, 0.0
  %vm427 = vcmp.ge.f32.partialorder %v377, 0.0
  %vm428 = vcmp.ge.f32.partialorder %v382, 0.0
  %vm429 = vcmp.ge.f32.partialorder %v387, 0.0
  %vm430 = vcmp.ge.f32.partialorder %v392, 0.0
  %vm431 = vcmp.ge.f32.partialorder %v397, 0.0
  %s432 = sld [smem:[#allocation2]]
  %v433 = vstv %s432
  %v434 = vmul.f32 %v433, %v242
  %v435 = vmul.f32 %v433, %v247
  %v436 = vmul.f32 %v433, %v252
  %v437 = vmul.f32 %v433, %v257
  %v438 = vmul.f32 %v433, %v262
  %v439 = vmul.f32 %v433, %v267
  %v440 = vmul.f32 %v433, %v272
  %v441 = vmul.f32 %v433, %v277
  %v442 = vmul.f32 %v433, %v282
  %v443 = vmul.f32 %v433, %v287
  %v444 = vmul.f32 %v433, %v292
  %v445 = vmul.f32 %v433, %v297
  %v446 = vmul.f32 %v433, %v302
  %v447 = vmul.f32 %v433, %v307
  %v448 = vmul.f32 %v433, %v312
  %v449 = vmul.f32 %v433, %v317
  %v450 = vmul.f32 %v433, %v322
  %v451 = vmul.f32 %v433, %v327
  %v452 = vmul.f32 %v433, %v332
  %v453 = vmul.f32 %v433, %v337
  %v454 = vmul.f32 %v433, %v342
  %v455 = vmul.f32 %v433, %v347
  %v456 = vmul.f32 %v433, %v352
  %v457 = vmul.f32 %v433, %v357
  %v458 = vmul.f32 %v433, %v362
  %v459 = vmul.f32 %v433, %v367
  %v460 = vmul.f32 %v433, %v372
  %v461 = vmul.f32 %v433, %v377
  %v462 = vmul.f32 %v433, %v382
  %v463 = vmul.f32 %v433, %v387
  %v464 = vmul.f32 %v433, %v392
  %v465 = vmul.f32 %v433, %v397
  %v466 = vsel %vm400, %v242, %v434
  %v467 = vsel %vm401, %v247, %v435
  %v468 = vsel %vm402, %v252, %v436
  %v469 = vsel %vm403, %v257, %v437
  %v470 = vsel %vm404, %v262, %v438
  %v471 = vsel %vm405, %v267, %v439
  %v472 = vsel %vm406, %v272, %v440
  %v473 = vsel %vm407, %v277, %v441
  %v474 = vsel %vm408, %v282, %v442
  %v475 = vsel %vm409, %v287, %v443
  %v476 = vsel %vm410, %v292, %v444
  %v477 = vsel %vm411, %v297, %v445
  %v478 = vsel %vm412, %v302, %v446
  %v479 = vsel %vm413, %v307, %v447
  %v480 = vsel %vm414, %v312, %v448
  %v481 = vsel %vm415, %v317, %v449
  %v482 = vsel %vm416, %v322, %v450
  %v483 = vsel %vm417, %v327, %v451
  %v484 = vsel %vm418, %v332, %v452
  %v485 = vsel %vm419, %v337, %v453
  %v486 = vsel %vm420, %v342, %v454
  %v487 = vsel %vm421, %v347, %v455
  %v488 = vsel %vm422, %v352, %v456
  %v489 = vsel %vm423, %v357, %v457
  %v490 = vsel %vm424, %v362, %v458
  %v491 = vsel %vm425, %v367, %v459
  %v492 = vsel %vm426, %v372, %v460
  %v493 = vsel %vm427, %v377, %v461
  %v494 = vsel %vm428, %v382, %v462
  %v495 = vsel %vm429, %v387, %v463
  %v496 = vsel %vm430, %v392, %v464
  %v497 = vsel %vm431, %v397, %v465
  %v498 = vld [vmem:[%s3] sm:$0xff]
  %v499 = vld [vmem:[%s3 + $0x8] sm:$0xff]
  %v500 = vld [vmem:[%s3 + $0x10] sm:$0xff]
  %v501 = vld [vmem:[%s3 + $0x18] sm:$0xff]
  %v502 = vld [vmem:[%s3 + $0x20] sm:$0xff]
  %v503 = vld [vmem:[%s3 + $0x28] sm:$0xff]
  %v504 = vld [vmem:[%s3 + $0x30] sm:$0xff]
  %v505 = vld [vmem:[%s3 + $0x38] sm:$0xff]
  %v506 = vld [vmem:[%s4] sm:$0x1]
  %v508 = vlaneseq
  %v509 = vshrl.u32 %v508, 7
  %v510 = vsub.s32 0, %v509
  %v511 = vrot.slane %v506, %v510
  %vm513 = vcmask 523264
  %v515 = vsel %vm513, %v466, 0
  %v518 = vsel %vm513, %v467, 0
  %v521 = vsel %vm513, %v468, 0
  %v524 = vsel %vm513, %v469, 0
  %v527 = vsel %vm513, %v470, 0
  %v530 = vsel %vm513, %v471, 0
  %v533 = vsel %vm513, %v472, 0
  %v536 = vsel %vm513, %v473, 0
  %v539 = vsel %vm513, %v474, 0
  %v542 = vsel %vm513, %v475, 0
  %v545 = vsel %vm513, %v476, 0
  %v548 = vsel %vm513, %v477, 0
  %v551 = vsel %vm513, %v478, 0
  %v554 = vsel %vm513, %v479, 0
  %v557 = vsel %vm513, %v480, 0
  %v560 = vsel %vm513, %v481, 0
  %v563 = vsel %vm513, %v482, 0
  %v566 = vsel %vm513, %v483, 0
  %v569 = vsel %vm513, %v484, 0
  %v572 = vsel %vm513, %v485, 0
  %v575 = vsel %vm513, %v486, 0
  %v578 = vsel %vm513, %v487, 0
  %v581 = vsel %vm513, %v488, 0
  %v584 = vsel %vm513, %v489, 0
  %v587 = vsel %vm513, %v490, 0
  %v590 = vsel %vm513, %v491, 0
  %v593 = vsel %vm513, %v492, 0
  %v596 = vsel %vm513, %v493, 0
  %v599 = vsel %vm513, %v494, 0
  %v602 = vsel %vm513, %v495, 0
  %v605 = vsel %vm513, %v496, 0
  %v608 = vsel %vm513, %v497, 0
  %610 = vmatprep.subr.mxu0 0.0
  %611 = vmatpush1.msra.mxu0 0.0
  %612 = vmatprep.subr.mxu0 0.0
  %613 = vmatpush1.msra.mxu0 0.0
  %614 = vmatprep.subr.mxu0 0.0
  %615 = vmatpush1.msra.mxu0 0.0
  %616 = vmatprep.subr.mxu0 0.0
  %617 = vmatpush1.msra.mxu0 0.0
  %618 = vmatprep.subr.mxu0 0.0
  %619 = vmatpush1.msra.mxu0 0.0
  %620 = vmatprep.subr.mxu0 0.0
  %621 = vmatpush1.msra.mxu0 0.0
  %622 = vmatprep.subr.mxu0 0.0
  %623 = vmatpush1.msra.mxu0 0.0
  %624 = vmatprep.subr.mxu0 0.0
  %625 = vmatpush1.msra.mxu0 0.0
  %626 = vmatprep.subr.mxu0 0.0
  %627 = vmatpush1.msra.mxu0 %v505
  %628 = vmatprep.subr.mxu0 0.0
  %629 = vmatpush1.msra.mxu0 %v504
  %630 = vmatprep.subr.mxu0 0.0
  %631 = vmatpush1.msra.mxu0 %v503
  %632 = vmatprep.subr.mxu0 0.0
  %633 = vmatpush1.msra.mxu0 %v502
  %634 = vmatprep.subr.mxu0 0.0
  %635 = vmatpush1.msra.mxu0 %v501
  %636 = vmatprep.subr.mxu0 0.0
  %637 = vmatpush1.msra.mxu0 %v500
  %638 = vmatprep.subr.mxu0 0.0
  %639 = vmatpush1.msra.mxu0 %v499
  %640 = vmatprep.subr.mxu0 0.0
  %641 = vmatpush1.msra.mxu0 %v498
  %642 = vmatprep.subr.mxu0 0.0
  %643 = vmatpush2.msra.mxu0 0.0
  %644 = vmatprep.subr.mxu0 0.0
  %645 = vmatpush2.msra.mxu0 0.0
  %646 = vmatprep.subr.mxu0 0.0
  %647 = vmatpush2.msra.mxu0 0.0
  %648 = vmatprep.subr.mxu0 0.0
  %649 = vmatpush2.msra.mxu0 0.0
  %650 = vmatprep.subr.mxu0 0.0
  %651 = vmatpush2.msra.mxu0 0.0
  %652 = vmatprep.subr.mxu0 0.0
  %653 = vmatpush2.msra.mxu0 0.0
  %654 = vmatprep.subr.mxu0 0.0
  %655 = vmatpush2.msra.mxu0 0.0
  %656 = vmatprep.subr.mxu0 0.0
  %657 = vmatpush2.msra.mxu0 0.0
  %658 = vmatprep.subr.mxu0 0.0
  %659 = vmatpush2.msra.mxu0 0.0
  %660 = vmatprep.subr.mxu0 0.0
  %661 = vmatpush2.msra.mxu0 0.0
  %662 = vmatprep.subr.mxu0 0.0
  %663 = vmatpush2.msra.mxu0 0.0
  %664 = vmatprep.subr.mxu0 0.0
  %665 = vmatpush2.msra.mxu0 0.0
  %666 = vmatprep.subr.mxu0 0.0
  %667 = vmatpush2.msra.mxu0 0.0
  %668 = vmatprep.subr.mxu0 0.0
  %669 = vmatpush2.msra.mxu0 0.0
  %670 = vmatprep.subr.mxu0 0.0
  %671 = vmatpush2.msra.mxu0 0.0
  %672 = vmatprep.subr.mxu0 0.0
  %673 = vmatpush2.msra.mxu0 0.0
  %674 = vmatprep.mubr.f32.mxu0 0.0
  %675 = vmatmul.mubr.f32.gmra.mxu0 %v515
  %v676 = vpop.f32.mrf.mxu0
  %v677 = vadd.f32 %v511, %v676
  %v678 = vpop.f32.mrf.mxu0
  %679 = vmatprep.mubr.f32.mxu0 0.0
  %680 = vmatmul.mubr.f32.gmra.mxu0 %v518
  %v681 = vpop.f32.mrf.mxu0
  %v682 = vadd.f32 %v511, %v681
  %v683 = vpop.f32.mrf.mxu0
  %684 = vmatprep.mubr.f32.mxu0 0.0
  %685 = vmatmul.mubr.f32.gmra.mxu0 %v521
  %v686 = vpop.f32.mrf.mxu0
  %v687 = vadd.f32 %v511, %v686
  %v688 = vpop.f32.mrf.mxu0
  %689 = vmatprep.mubr.f32.mxu0 0.0
  %690 = vmatmul.mubr.f32.gmra.mxu0 %v524
  %v691 = vpop.f32.mrf.mxu0
  %v692 = vadd.f32 %v511, %v691
  %v693 = vpop.f32.mrf.mxu0
  %694 = vmatprep.mubr.f32.mxu0 0.0
  %695 = vmatmul.mubr.f32.gmra.mxu0 %v527
  %v696 = vpop.f32.mrf.mxu0
  %v697 = vadd.f32 %v511, %v696
  %v698 = vpop.f32.mrf.mxu0
  %699 = vmatprep.mubr.f32.mxu0 0.0
  %700 = vmatmul.mubr.f32.gmra.mxu0 %v530
  %v701 = vpop.f32.mrf.mxu0
  %v702 = vadd.f32 %v511, %v701
  %v703 = vpop.f32.mrf.mxu0
  %704 = vmatprep.mubr.f32.mxu0 0.0
  %705 = vmatmul.mubr.f32.gmra.mxu0 %v533
  %v706 = vpop.f32.mrf.mxu0
  %v707 = vadd.f32 %v511, %v706
  %v708 = vpop.f32.mrf.mxu0
  %709 = vmatprep.mubr.f32.mxu0 0.0
  %710 = vmatmul.mubr.f32.gmra.mxu0 %v536
  %v711 = vpop.f32.mrf.mxu0
  %v712 = vadd.f32 %v511, %v711
  %v713 = vpop.f32.mrf.mxu0
  %714 = vmatprep.mubr.f32.mxu0 0.0
  %715 = vmatmul.mubr.f32.gmra.mxu0 %v539
  %v716 = vpop.f32.mrf.mxu0
  %v717 = vadd.f32 %v511, %v716
  %v718 = vpop.f32.mrf.mxu0
  %719 = vmatprep.mubr.f32.mxu0 0.0
  %720 = vmatmul.mubr.f32.gmra.mxu0 %v542
  %v721 = vpop.f32.mrf.mxu0
  %v722 = vadd.f32 %v511, %v721
  %v723 = vpop.f32.mrf.mxu0
  %724 = vmatprep.mubr.f32.mxu0 0.0
  %725 = vmatmul.mubr.f32.gmra.mxu0 %v545
  %v726 = vpop.f32.mrf.mxu0
  %v727 = vadd.f32 %v511, %v726
  %v728 = vpop.f32.mrf.mxu0
  %729 = vmatprep.mubr.f32.mxu0 0.0
  %730 = vmatmul.mubr.f32.gmra.mxu0 %v548
  %v731 = vpop.f32.mrf.mxu0
  %v732 = vadd.f32 %v511, %v731
  %v733 = vpop.f32.mrf.mxu0
  %734 = vmatprep.mubr.f32.mxu0 0.0
  %735 = vmatmul.mubr.f32.gmra.mxu0 %v551
  %v736 = vpop.f32.mrf.mxu0
  %v737 = vadd.f32 %v511, %v736
  %v738 = vpop.f32.mrf.mxu0
  %739 = vmatprep.mubr.f32.mxu0 0.0
  %740 = vmatmul.mubr.f32.gmra.mxu0 %v554
  %v741 = vpop.f32.mrf.mxu0
  %v742 = vadd.f32 %v511, %v741
  %v743 = vpop.f32.mrf.mxu0
  %744 = vmatprep.mubr.f32.mxu0 0.0
  %745 = vmatmul.mubr.f32.gmra.mxu0 %v557
  %v746 = vpop.f32.mrf.mxu0
  %v747 = vadd.f32 %v511, %v746
  %v748 = vpop.f32.mrf.mxu0
  %749 = vmatprep.mubr.f32.mxu0 0.0
  %750 = vmatmul.mubr.f32.gmra.mxu0 %v560
  %v751 = vpop.f32.mrf.mxu0
  %v752 = vadd.f32 %v511, %v751
  %v753 = vpop.f32.mrf.mxu0
  %754 = vmatprep.mubr.f32.mxu0 0.0
  %755 = vmatmul.mubr.f32.gmra.mxu0 %v563
  %v756 = vpop.f32.mrf.mxu0
  %v757 = vadd.f32 %v511, %v756
  %v758 = vpop.f32.mrf.mxu0
  %759 = vmatprep.mubr.f32.mxu0 0.0
  %760 = vmatmul.mubr.f32.gmra.mxu0 %v566
  %v761 = vpop.f32.mrf.mxu0
  %v762 = vadd.f32 %v511, %v761
  %v763 = vpop.f32.mrf.mxu0
  %764 = vmatprep.mubr.f32.mxu0 0.0
  %765 = vmatmul.mubr.f32.gmra.mxu0 %v569
  %v766 = vpop.f32.mrf.mxu0
  %v767 = vadd.f32 %v511, %v766
  %v768 = vpop.f32.mrf.mxu0
  %769 = vmatprep.mubr.f32.mxu0 0.0
  %770 = vmatmul.mubr.f32.gmra.mxu0 %v572
  %v771 = vpop.f32.mrf.mxu0
  %v772 = vadd.f32 %v511, %v771
  %v773 = vpop.f32.mrf.mxu0
  %774 = vmatprep.mubr.f32.mxu0 0.0
  %775 = vmatmul.mubr.f32.gmra.mxu0 %v575
  %v776 = vpop.f32.mrf.mxu0
  %v777 = vadd.f32 %v511, %v776
  %v778 = vpop.f32.mrf.mxu0
  %779 = vmatprep.mubr.f32.mxu0 0.0
  %780 = vmatmul.mubr.f32.gmra.mxu0 %v578
  %v781 = vpop.f32.mrf.mxu0
  %v782 = vadd.f32 %v511, %v781
  %v783 = vpop.f32.mrf.mxu0
  %784 = vmatprep.mubr.f32.mxu0 0.0
  %785 = vmatmul.mubr.f32.gmra.mxu0 %v581
  %v786 = vpop.f32.mrf.mxu0
  %v787 = vadd.f32 %v511, %v786
  %v788 = vpop.f32.mrf.mxu0
  %789 = vmatprep.mubr.f32.mxu0 0.0
  %790 = vmatmul.mubr.f32.gmra.mxu0 %v584
  %v791 = vpop.f32.mrf.mxu0
  %v792 = vadd.f32 %v511, %v791
  %v793 = vpop.f32.mrf.mxu0
  %794 = vmatprep.mubr.f32.mxu0 0.0
  %795 = vmatmul.mubr.f32.gmra.mxu0 %v587
  %v796 = vpop.f32.mrf.mxu0
  %v797 = vadd.f32 %v511, %v796
  %v798 = vpop.f32.mrf.mxu0
  %799 = vmatprep.mubr.f32.mxu0 0.0
  %800 = vmatmul.mubr.f32.gmra.mxu0 %v590
  %v801 = vpop.f32.mrf.mxu0
  %v802 = vadd.f32 %v511, %v801
  %v803 = vpop.f32.mrf.mxu0
  %804 = vmatprep.mubr.f32.mxu0 0.0
  %805 = vmatmul.mubr.f32.gmra.mxu0 %v593
  %v806 = vpop.f32.mrf.mxu0
  %v807 = vadd.f32 %v511, %v806
  %v808 = vpop.f32.mrf.mxu0
  %809 = vmatprep.mubr.f32.mxu0 0.0
  %810 = vmatmul.mubr.f32.gmra.mxu0 %v596
  %v811 = vpop.f32.mrf.mxu0
  %v812 = vadd.f32 %v511, %v811
  %v813 = vpop.f32.mrf.mxu0
  %814 = vmatprep.mubr.f32.mxu0 0.0
  %815 = vmatmul.mubr.f32.gmra.mxu0 %v599
  %v816 = vpop.f32.mrf.mxu0
  %v817 = vadd.f32 %v511, %v816
  %v818 = vpop.f32.mrf.mxu0
  %819 = vmatprep.mubr.f32.mxu0 0.0
  %820 = vmatmul.mubr.f32.gmra.mxu0 %v602
  %v821 = vpop.f32.mrf.mxu0
  %v822 = vadd.f32 %v511, %v821
  %v823 = vpop.f32.mrf.mxu0
  %824 = vmatprep.mubr.f32.mxu0 0.0
  %825 = vmatmul.mubr.f32.gmra.mxu0 %v605
  %v826 = vpop.f32.mrf.mxu0
  %v827 = vadd.f32 %v511, %v826
  %v828 = vpop.f32.mrf.mxu0
  %829 = vmatprep.mubr.f32.mxu0 0.0
  %830 = vmatmul.mubr.f32.gmra.mxu0 %v608
  %v831 = vpop.f32.mrf.mxu0
  %v832 = vadd.f32 %v511, %v831
  %v833 = vpop.f32.mrf.mxu0
  %834 = vdwg.mxu0
  %vm835 = vcmp.ge.f32.partialorder %v677, 0.0
  %vm836 = vcmp.ge.f32.partialorder %v682, 0.0
  %vm837 = vcmp.ge.f32.partialorder %v687, 0.0
  %vm838 = vcmp.ge.f32.partialorder %v692, 0.0
  %vm839 = vcmp.ge.f32.partialorder %v697, 0.0
  %vm840 = vcmp.ge.f32.partialorder %v702, 0.0
  %vm841 = vcmp.ge.f32.partialorder %v707, 0.0
  %vm842 = vcmp.ge.f32.partialorder %v712, 0.0
  %vm843 = vcmp.ge.f32.partialorder %v717, 0.0
  %vm844 = vcmp.ge.f32.partialorder %v722, 0.0
  %vm845 = vcmp.ge.f32.partialorder %v727, 0.0
  %vm846 = vcmp.ge.f32.partialorder %v732, 0.0
  %vm847 = vcmp.ge.f32.partialorder %v737, 0.0
  %vm848 = vcmp.ge.f32.partialorder %v742, 0.0
  %vm849 = vcmp.ge.f32.partialorder %v747, 0.0
  %vm850 = vcmp.ge.f32.partialorder %v752, 0.0
  %vm851 = vcmp.ge.f32.partialorder %v757, 0.0
  %vm852 = vcmp.ge.f32.partialorder %v762, 0.0
  %vm853 = vcmp.ge.f32.partialorder %v767, 0.0
  %vm854 = vcmp.ge.f32.partialorder %v772, 0.0
  %vm855 = vcmp.ge.f32.partialorder %v777, 0.0
  %vm856 = vcmp.ge.f32.partialorder %v782, 0.0
  %vm857 = vcmp.ge.f32.partialorder %v787, 0.0
  %vm858 = vcmp.ge.f32.partialorder %v792, 0.0
  %vm859 = vcmp.ge.f32.partialorder %v797, 0.0
  %vm860 = vcmp.ge.f32.partialorder %v802, 0.0
  %vm861 = vcmp.ge.f32.partialorder %v807, 0.0
  %vm862 = vcmp.ge.f32.partialorder %v812, 0.0
  %vm863 = vcmp.ge.f32.partialorder %v817, 0.0
  %vm864 = vcmp.ge.f32.partialorder %v822, 0.0
  %vm865 = vcmp.ge.f32.partialorder %v827, 0.0
  %vm866 = vcmp.ge.f32.partialorder %v832, 0.0
  %s867 = sld [smem:[#allocation3]]
  %v868 = vstv %s867
  %v869 = vmul.f32 %v868, %v677
  %v870 = vmul.f32 %v868, %v682
  %v871 = vmul.f32 %v868, %v687
  %v872 = vmul.f32 %v868, %v692
  %v873 = vmul.f32 %v868, %v697
  %v874 = vmul.f32 %v868, %v702
  %v875 = vmul.f32 %v868, %v707
  %v876 = vmul.f32 %v868, %v712
  %v877 = vmul.f32 %v868, %v717
  %v878 = vmul.f32 %v868, %v722
  %v879 = vmul.f32 %v868, %v727
  %v880 = vmul.f32 %v868, %v732
  %v881 = vmul.f32 %v868, %v737
  %v882 = vmul.f32 %v868, %v742
  %v883 = vmul.f32 %v868, %v747
  %v884 = vmul.f32 %v868, %v752
  %v885 = vmul.f32 %v868, %v757
  %v886 = vmul.f32 %v868, %v762
  %v887 = vmul.f32 %v868, %v767
  %v888 = vmul.f32 %v868, %v772
  %v889 = vmul.f32 %v868, %v777
  %v890 = vmul.f32 %v868, %v782
  %v891 = vmul.f32 %v868, %v787
  %v892 = vmul.f32 %v868, %v792
  %v893 = vmul.f32 %v868, %v797
  %v894 = vmul.f32 %v868, %v802
  %v895 = vmul.f32 %v868, %v807
  %v896 = vmul.f32 %v868, %v812
  %v897 = vmul.f32 %v868, %v817
  %v898 = vmul.f32 %v868, %v822
  %v899 = vmul.f32 %v868, %v827
  %v900 = vmul.f32 %v868, %v832
  %v901 = vsel %vm835, %v677, %v869
  %v902 = vsel %vm836, %v682, %v870
  %v903 = vsel %vm837, %v687, %v871
  %v904 = vsel %vm838, %v692, %v872
  %v905 = vsel %vm839, %v697, %v873
  %v906 = vsel %vm840, %v702, %v874
  %v907 = vsel %vm841, %v707, %v875
  %v908 = vsel %vm842, %v712, %v876
  %v909 = vsel %vm843, %v717, %v877
  %v910 = vsel %vm844, %v722, %v878
  %v911 = vsel %vm845, %v727, %v879
  %v912 = vsel %vm846, %v732, %v880
  %v913 = vsel %vm847, %v737, %v881
  %v914 = vsel %vm848, %v742, %v882
  %v915 = vsel %vm849, %v747, %v883
  %v916 = vsel %vm850, %v752, %v884
  %v917 = vsel %vm851, %v757, %v885
  %v918 = vsel %vm852, %v762, %v886
  %v919 = vsel %vm853, %v767, %v887
  %v920 = vsel %vm854, %v772, %v888
  %v921 = vsel %vm855, %v777, %v889
  %v922 = vsel %vm856, %v782, %v890
  %v923 = vsel %vm857, %v787, %v891
  %v924 = vsel %vm858, %v792, %v892
  %v925 = vsel %vm859, %v797, %v893
  %v926 = vsel %vm860, %v802, %v894
  %v927 = vsel %vm861, %v807, %v895
  %v928 = vsel %vm862, %v812, %v896
  %v929 = vsel %vm863, %v817, %v897
  %v930 = vsel %vm864, %v822, %v898
  %v931 = vsel %vm865, %v827, %v899
  %v932 = vsel %vm866, %v832, %v900
  %v933 = vld [vmem:[%s5] sm:$0x1]
  %v935 = vlaneseq
  %v936 = vshrl.u32 %v935, 7
  %v937 = vsub.s32 0, %v936
  %v938 = vrot.slane %v933, %v937
  %v940 = vmul.f32 %v901, %v938
  %v941 = vmul.f32 %v902, %v938
  %v942 = vmul.f32 %v903, %v938
  %v943 = vmul.f32 %v904, %v938
  %v944 = vmul.f32 %v905, %v938
  %v945 = vmul.f32 %v906, %v938
  %v946 = vmul.f32 %v907, %v938
  %v947 = vmul.f32 %v908, %v938
  %v948 = vmul.f32 %v909, %v938
  %v949 = vmul.f32 %v910, %v938
  %v950 = vmul.f32 %v911, %v938
  %v951 = vmul.f32 %v912, %v938
  %v952 = vmul.f32 %v913, %v938
  %v953 = vmul.f32 %v914, %v938
  %v954 = vmul.f32 %v915, %v938
  %v955 = vmul.f32 %v916, %v938
  %v956 = vmul.f32 %v917, %v938
  %v957 = vmul.f32 %v918, %v938
  %v958 = vmul.f32 %v919, %v938
  %v959 = vmul.f32 %v920, %v938
  %v960 = vmul.f32 %v921, %v938
  %v961 = vmul.f32 %v922, %v938
  %v962 = vmul.f32 %v923, %v938
  %v963 = vmul.f32 %v924, %v938
  %v964 = vmul.f32 %v925, %v938
  %v965 = vmul.f32 %v926, %v938
  %v966 = vmul.f32 %v927, %v938
  %v967 = vmul.f32 %v928, %v938
  %v968 = vmul.f32 %v929, %v938
  %v969 = vmul.f32 %v930, %v938
  %v970 = vmul.f32 %v931, %v938
  %v971 = vmul.f32 %v932, %v938
  %v972 = vsel %vm78, %v940, 0.0
  %973 = vadd.xlane.f32.xlu0 %v972
  %v974 = vpop.xlane.xlu0 %973
  %v975 = vsel %vm78, %v941, 0.0
  %976 = vadd.xlane.f32.xlu0 %v975
  %v977 = vpop.xlane.xlu0 %976
  %v978 = vsel %vm78, %v942, 0.0
  %979 = vadd.xlane.f32.xlu0 %v978
  %v980 = vpop.xlane.xlu0 %979
  %v981 = vsel %vm78, %v943, 0.0
  %982 = vadd.xlane.f32.xlu0 %v981
  %v983 = vpop.xlane.xlu0 %982
  %v984 = vsel %vm78, %v944, 0.0
  %985 = vadd.xlane.f32.xlu0 %v984
  %v986 = vpop.xlane.xlu0 %985
  %v987 = vsel %vm78, %v945, 0.0
  %988 = vadd.xlane.f32.xlu0 %v987
  %v989 = vpop.xlane.xlu0 %988
  %v990 = vsel %vm78, %v946, 0.0
  %991 = vadd.xlane.f32.xlu0 %v990
  %v992 = vpop.xlane.xlu0 %991
  %v993 = vsel %vm78, %v947, 0.0
  %994 = vadd.xlane.f32.xlu0 %v993
  %v995 = vpop.xlane.xlu0 %994
  %v996 = vsel %vm78, %v948, 0.0
  %997 = vadd.xlane.f32.xlu0 %v996
  %v998 = vpop.xlane.xlu0 %997
  %v999 = vsel %vm78, %v949, 0.0
  %1000 = vadd.xlane.f32.xlu0 %v999
  %v1001 = vpop.xlane.xlu0 %1000
  %v1002 = vsel %vm78, %v950, 0.0
  %1003 = vadd.xlane.f32.xlu0 %v1002
  %v1004 = vpop.xlane.xlu0 %1003
  %v1005 = vsel %vm78, %v951, 0.0
  %1006 = vadd.xlane.f32.xlu0 %v1005
  %v1007 = vpop.xlane.xlu0 %1006
  %v1008 = vsel %vm78, %v952, 0.0
  %1009 = vadd.xlane.f32.xlu0 %v1008
  %v1010 = vpop.xlane.xlu0 %1009
  %v1011 = vsel %vm78, %v953, 0.0
  %1012 = vadd.xlane.f32.xlu0 %v1011
  %v1013 = vpop.xlane.xlu0 %1012
  %v1014 = vsel %vm78, %v954, 0.0
  %1015 = vadd.xlane.f32.xlu0 %v1014
  %v1016 = vpop.xlane.xlu0 %1015
  %v1017 = vsel %vm78, %v955, 0.0
  %1018 = vadd.xlane.f32.xlu0 %v1017
  %v1019 = vpop.xlane.xlu0 %1018
  %v1020 = vsel %vm78, %v956, 0.0
  %1021 = vadd.xlane.f32.xlu0 %v1020
  %v1022 = vpop.xlane.xlu0 %1021
  %v1023 = vsel %vm78, %v957, 0.0
  %1024 = vadd.xlane.f32.xlu0 %v1023
  %v1025 = vpop.xlane.xlu0 %1024
  %v1026 = vsel %vm78, %v958, 0.0
  %1027 = vadd.xlane.f32.xlu0 %v1026
  %v1028 = vpop.xlane.xlu0 %1027
  %v1029 = vsel %vm78, %v959, 0.0
  %1030 = vadd.xlane.f32.xlu0 %v1029
  %v1031 = vpop.xlane.xlu0 %1030
  %v1032 = vsel %vm78, %v960, 0.0
  %1033 = vadd.xlane.f32.xlu0 %v1032
  %v1034 = vpop.xlane.xlu0 %1033
  %v1035 = vsel %vm78, %v961, 0.0
  %1036 = vadd.xlane.f32.xlu0 %v1035
  %v1037 = vpop.xlane.xlu0 %1036
  %v1038 = vsel %vm78, %v962, 0.0
  %1039 = vadd.xlane.f32.xlu0 %v1038
  %v1040 = vpop.xlane.xlu0 %1039
  %v1041 = vsel %vm78, %v963, 0.0
  %1042 = vadd.xlane.f32.xlu0 %v1041
  %v1043 = vpop.xlane.xlu0 %1042
  %v1044 = vsel %vm78, %v964, 0.0
  %1045 = vadd.xlane.f32.xlu0 %v1044
  %v1046 = vpop.xlane.xlu0 %1045
  %v1047 = vsel %vm78, %v965, 0.0
  %1048 = vadd.xlane.f32.xlu0 %v1047
  %v1049 = vpop.xlane.xlu0 %1048
  %v1050 = vsel %vm78, %v966, 0.0
  %1051 = vadd.xlane.f32.xlu0 %v1050
  %v1052 = vpop.xlane.xlu0 %1051
  %v1053 = vsel %vm78, %v967, 0.0
  %1054 = vadd.xlane.f32.xlu0 %v1053
  %v1055 = vpop.xlane.xlu0 %1054
  %v1056 = vsel %vm78, %v968, 0.0
  %1057 = vadd.xlane.f32.xlu0 %v1056
  %v1058 = vpop.xlane.xlu0 %1057
  %v1059 = vsel %vm78, %v969, 0.0
  %1060 = vadd.xlane.f32.xlu0 %v1059
  %v1061 = vpop.xlane.xlu0 %1060
  %v1062 = vsel %vm78, %v970, 0.0
  %1063 = vadd.xlane.f32.xlu0 %v1062
  %v1064 = vpop.xlane.xlu0 %1063
  %v1065 = vsel %vm78, %v971, 0.0
  %1066 = vadd.xlane.f32.xlu0 %v1065
  %v1067 = vpop.xlane.xlu0 %1066
  %s1068 = sld [smem:[#allocation4]]
  %v1069 = vstv %s1068
  %v1070 = vadd.f32 %v974, %v1069
  %v1071 = vadd.f32 %v977, %v1069
  %v1072 = vadd.f32 %v980, %v1069
  %v1073 = vadd.f32 %v983, %v1069
  %v1074 = vadd.f32 %v986, %v1069
  %v1075 = vadd.f32 %v989, %v1069
  %v1076 = vadd.f32 %v992, %v1069
  %v1077 = vadd.f32 %v995, %v1069
  %v1078 = vadd.f32 %v998, %v1069
  %v1079 = vadd.f32 %v1001, %v1069
  %v1080 = vadd.f32 %v1004, %v1069
  %v1081 = vadd.f32 %v1007, %v1069
  %v1082 = vadd.f32 %v1010, %v1069
  %v1083 = vadd.f32 %v1013, %v1069
  %v1084 = vadd.f32 %v1016, %v1069
  %v1085 = vadd.f32 %v1019, %v1069
  %v1086 = vadd.f32 %v1022, %v1069
  %v1087 = vadd.f32 %v1025, %v1069
  %v1088 = vadd.f32 %v1028, %v1069
  %v1089 = vadd.f32 %v1031, %v1069
  %v1090 = vadd.f32 %v1034, %v1069
  %v1091 = vadd.f32 %v1037, %v1069
  %v1092 = vadd.f32 %v1040, %v1069
  %v1093 = vadd.f32 %v1043, %v1069
  %v1094 = vadd.f32 %v1046, %v1069
  %v1095 = vadd.f32 %v1049, %v1069
  %v1096 = vadd.f32 %v1052, %v1069
  %v1097 = vadd.f32 %v1055, %v1069
  %v1098 = vadd.f32 %v1058, %v1069
  %v1099 = vadd.f32 %v1061, %v1069
  %v1100 = vadd.f32 %v1064, %v1069
  %v1101 = vadd.f32 %v1067, %v1069
  %vm1102 = vcmask 7168
  %1103 = vst.msk [vmem:[%s9] sm:$0xff] %vm1102, %v1070
  %1104 = vst.msk [vmem:[%s9 + $0x8] sm:$0xff] %vm1102, %v1071
  %1105 = vst.msk [vmem:[%s9 + $0x10] sm:$0xff] %vm1102, %v1072
  %1106 = vst.msk [vmem:[%s9 + $0x18] sm:$0xff] %vm1102, %v1073
  %1107 = vst.msk [vmem:[%s9 + $0x20] sm:$0xff] %vm1102, %v1074
  %1108 = vst.msk [vmem:[%s9 + $0x28] sm:$0xff] %vm1102, %v1075
  %1109 = vst.msk [vmem:[%s9 + $0x30] sm:$0xff] %vm1102, %v1076
  %1110 = vst.msk [vmem:[%s9 + $0x38] sm:$0xff] %vm1102, %v1077
  %1111 = vst.msk [vmem:[%s9 + $0x40] sm:$0xff] %vm1102, %v1078
  %1112 = vst.msk [vmem:[%s9 + $0x48] sm:$0xff] %vm1102, %v1079
  %1113 = vst.msk [vmem:[%s9 + $0x50] sm:$0xff] %vm1102, %v1080
  %1114 = vst.msk [vmem:[%s9 + $0x58] sm:$0xff] %vm1102, %v1081
  %1115 = vst.msk [vmem:[%s9 + $0x60] sm:$0xff] %vm1102, %v1082
  %1116 = vst.msk [vmem:[%s9 + $0x68] sm:$0xff] %vm1102, %v1083
  %1117 = vst.msk [vmem:[%s9 + $0x70] sm:$0xff] %vm1102, %v1084
  %1118 = vst.msk [vmem:[%s9 + $0x78] sm:$0xff] %vm1102, %v1085
  %1119 = vst.msk [vmem:[%s9 + $0x80] sm:$0xff] %vm1102, %v1086
  %1120 = vst.msk [vmem:[%s9 + $0x88] sm:$0xff] %vm1102, %v1087
  %1121 = vst.msk [vmem:[%s9 + $0x90] sm:$0xff] %vm1102, %v1088
  %1122 = vst.msk [vmem:[%s9 + $0x98] sm:$0xff] %vm1102, %v1089
  %1123 = vst.msk [vmem:[%s9 + $0xa0] sm:$0xff] %vm1102, %v1090
  %1124 = vst.msk [vmem:[%s9 + $0xa8] sm:$0xff] %vm1102, %v1091
  %1125 = vst.msk [vmem:[%s9 + $0xb0] sm:$0xff] %vm1102, %v1092
  %1126 = vst.msk [vmem:[%s9 + $0xb8] sm:$0xff] %vm1102, %v1093
  %1127 = vst.msk [vmem:[%s9 + $0xc0] sm:$0xff] %vm1102, %v1094
  %1128 = vst.msk [vmem:[%s9 + $0xc8] sm:$0xff] %vm1102, %v1095
  %1129 = vst.msk [vmem:[%s9 + $0xd0] sm:$0xff] %vm1102, %v1096
  %1130 = vst.msk [vmem:[%s9 + $0xd8] sm:$0xff] %vm1102, %v1097
  %1131 = vst.msk [vmem:[%s9 + $0xe0] sm:$0xff] %vm1102, %v1098
  %1132 = vst.msk [vmem:[%s9 + $0xe8] sm:$0xff] %vm1102, %v1099
  %1133 = vst.msk [vmem:[%s9 + $0xf0] sm:$0xff] %vm1102, %v1100
  %1134 = vst.msk [vmem:[%s9 + $0xf8] sm:$0xff] %vm1102, %v1101
  // Predicated region
  $region38: #{tpu_custom_call.1} parent=0 // pred_check
    _
  $region39: #{tpu_custom_call.1} parent=0 // pred_check_branch
    %1136 = sbr.rel (0) target = $region41
  $region40: #{tpu_custom_call.1} parent=0 // pred_region
    _
  $region41: #{tpu_custom_call.1} parent=0 // pred_fallthru
    _
  // Predicated region
  $region42: #{tpu_custom_call.1} parent=0 // pred_check
    _
  $region43: #{tpu_custom_call.1} parent=0 // pred_check_branch
    %1138 = sbr.rel (0) target = $region45
  $region44: #{tpu_custom_call.1} parent=0 // pred_region
    _
  $region45: #{tpu_custom_call.1} parent=0 // pred_fallthru
    _

</llo_original>
